<compile_context>
chip_gen: v7x
topology: tpu7x:2x2x1
jax: 0.10.0
libtpu: 0.0.40
codegen_flags: <defaults>
</compile_context>

<pallas_src>
import jax
import jax.numpy as jnp
from jax.experimental import pallas as pl
from jax.experimental.pallas import tpu as pltpu


def attention_kernel(enc_ref, dec_ref, we_ref, be_ref, wd_ref, bd_ref,
                     wf_ref, bf_ref, awe_ref, alpha_ref):
    # Per-grid-step views (one batch block of TB elements):
    #   enc_ref:   (TB, P, E)   dec_ref:   (TB, D)
    #   we_ref:    (E, A)       be_ref:    (1, A)
    #   wd_ref:    (D, A)       bd_ref:    (1, A)
    #   wf_ref:    (1, A)       bf_ref:    (1,)  in SMEM
    #   awe_ref:   (TB, E)      alpha_ref: (TB, P)
    TB, P, E = enc_ref.shape
    A = we_ref.shape[1]

    enc = enc_ref[...]                                     # (TB, P, E)
    dec = dec_ref[...]                                     # (TB, D)

    # encoder_att(encoder_out): fold (TB, P) into M -> one tall MXU matmul.
    att1 = jnp.dot(enc.reshape(TB * P, E), we_ref[...],
                   preferred_element_type=jnp.float32) + be_ref[...]   # (TB*P, A)

    # decoder_att(decoder_hidden): one matmul for the whole batch block.
    att2 = jnp.dot(dec, wd_ref[...],
                   preferred_element_type=jnp.float32) + bd_ref[...]   # (TB, A)

    # relu(att1 + att2.unsqueeze(1))
    h = jnp.maximum(att1.reshape(TB, P, A) + att2[:, None, :], 0.0)    # (TB, P, A)

    # full_att(...).squeeze(2): per-pixel scores, kept lane-dense as (TB, P).
    scores = jnp.sum(h * wf_ref[...], axis=-1) + bf_ref[0]             # (TB, P)

    # softmax over the pixel (lane) axis.
    m = jnp.max(scores, axis=-1, keepdims=True)                        # (TB, 1)
    e = jnp.exp(scores - m)
    denom = jnp.sum(e, axis=-1, keepdims=True)                         # (TB, 1)
    alpha = e * pl.reciprocal(denom, approx=True)                      # (TB, P)

    # attention-weighted encoding on the MXU: (TB,1,P) @ (TB,P,E) -> (TB,1,E)
    awe = jnp.einsum('bqp,bpe->bqe', alpha[:, None, :], enc,
                     preferred_element_type=jnp.float32)

    awe_ref[...] = awe.reshape(TB, E).astype(awe_ref.dtype)
    alpha_ref[...] = alpha.astype(alpha_ref.dtype)


def attention_forward(encoder_out, decoder_hidden, params, *, batch_block=8):
    B, P, E = encoder_out.shape
    D = decoder_hidden.shape[1]
    A = params["we"].shape[1]

    # Batch-block size: 8 divides sublane tiling cleanly; clamp to B for tiny batches.
    TB = min(B, batch_block)
    B_pad = pl.cdiv(B, TB) * TB
    if B_pad != B:
        pad = B_pad - B
        encoder_out = jnp.pad(encoder_out, ((0, pad), (0, 0), (0, 0)))
        decoder_hidden = jnp.pad(decoder_hidden, ((0, pad), (0, 0)))

    be = params["be"].reshape(1, A)
    bd = params["bd"].reshape(1, A)
    wf = params["wf"].reshape(1, A)
    bf = params["bf"].reshape(1).astype(jnp.float32)

    awe, alpha = pl.pallas_call(
        attention_kernel,
        grid=(B_pad // TB,),
        in_specs=[
            pl.BlockSpec((TB, P, E), lambda b: (b, 0, 0)),      # encoder_out
            pl.BlockSpec((TB, D), lambda b: (b, 0)),            # decoder_hidden
            pl.BlockSpec((E, A), lambda b: (0, 0)),             # W_e
            pl.BlockSpec((1, A), lambda b: (0, 0)),             # b_e
            pl.BlockSpec((D, A), lambda b: (0, 0)),             # W_d
            pl.BlockSpec((1, A), lambda b: (0, 0)),             # b_d
            pl.BlockSpec((1, A), lambda b: (0, 0)),             # W_f
            pl.BlockSpec(memory_space=pltpu.MemorySpace.SMEM),  # b_f (scalar)
        ],
        out_specs=[
            pl.BlockSpec((TB, E), lambda b: (b, 0)),            # weighted encoding
            pl.BlockSpec((TB, P), lambda b: (b, 0)),            # alpha (lane-dense)
        ],
        out_shape=[
            jax.ShapeDtypeStruct((B_pad, E), encoder_out.dtype),
            jax.ShapeDtypeStruct((B_pad, P), jnp.float32),
        ],
        compiler_params=pltpu.CompilerParams(
            dimension_semantics=("parallel",)),    # shards batch blocks across TCs on v7x
    )(encoder_out, decoder_hidden, params["we"], be, params["wd"], bd, wf, bf)

    return awe[:B], alpha[:B]


def attention_reference(encoder_out, decoder_hidden, params):
    att1 = encoder_out @ params["we"] + params["be"]                # (B, P, A)
    att2 = decoder_hidden @ params["wd"] + params["bd"]             # (B, A)
    h = jnp.maximum(att1 + att2[:, None, :], 0.0)                   # (B, P, A)
    att = (h @ params["wf"].reshape(-1, 1))[..., 0] + params["bf"]  # (B, P)
    alpha = jax.nn.softmax(att, axis=1)
    awe = jnp.sum(encoder_out * alpha[:, :, None], axis=1)          # (B, E)
    return awe, alpha


def make_params(key, encoder_dim, decoder_dim, attention_dim):
    k = jax.random.split(key, 6)
    scale = 0.1
    return {
        "we": scale * jax.random.normal(k[0], (encoder_dim, attention_dim), jnp.float32),
        "be": scale * jax.random.normal(k[1], (attention_dim,), jnp.float32),
        "wd": scale * jax.random.normal(k[2], (decoder_dim, attention_dim), jnp.float32),
        "bd": scale * jax.random.normal(k[3], (attention_dim,), jnp.float32),
        "wf": scale * jax.random.normal(k[4], (attention_dim,), jnp.float32),
        "bf": scale * jax.random.normal(k[5], (), jnp.float32),
    }


if __name__ == "__main__":
    B, P, E, D, A = 2, 16, 32, 32, 32   # batch, num_pixels, encoder/decoder/attention dims

    key = jax.random.PRNGKey(0)
    k_enc, k_dec, k_par = jax.random.split(key, 3)
    encoder_out = jax.random.normal(k_enc, (B, P, E), jnp.float32)
    decoder_hidden = jax.random.normal(k_dec, (B, D), jnp.float32)
    params = make_params(k_par, E, D, A)

    awe, alpha = attention_forward(encoder_out, decoder_hidden, params)
    awe = jax.block_until_ready(awe)
    alpha = jax.block_until_ready(alpha)

    awe_ref, alpha_ref = attention_reference(encoder_out, decoder_hidden, params)
    assert awe.shape == (B, E) and alpha.shape == (B, P)
    # Tolerance accounts for the approximate (EUP) reciprocal in the softmax denom.
    assert jnp.allclose(awe, awe_ref, atol=5e-3, rtol=5e-3)
    assert jnp.allclose(alpha, alpha_ref, atol=5e-3, rtol=5e-3)

    print("KERNEL_OK")
</pallas_src>

<mosaic_0001>
module attributes {stable_mosaic.version = 11 : i64} {
  func.func @attention_kernel(%arg0: i32, %arg1: memref<2x16x32xf32, #tpu.memory_space<vmem>>, %arg2: memref<2x32xf32, #tpu.memory_space<vmem>>, %arg3: memref<32x32xf32, #tpu.memory_space<vmem>>, %arg4: memref<1x32xf32, #tpu.memory_space<vmem>>, %arg5: memref<32x32xf32, #tpu.memory_space<vmem>>, %arg6: memref<1x32xf32, #tpu.memory_space<vmem>>, %arg7: memref<1x32xf32, #tpu.memory_space<vmem>>, %arg8: memref<1xf32, #tpu.memory_space<smem>>, %arg9: memref<2x32xf32, #tpu.memory_space<vmem>>, %arg10: memref<2x16xf32, #tpu.memory_space<vmem>>) attributes {dimension_semantics = [#tpu.dimension_semantics<parallel>], iteration_bounds = array<i64: 1>, scalar_prefetch = 0 : i64, scratch_operands = 0 : i64, tpu.core_type = #tpu.core_type<tc>, window_params = [{transform_indices = @transform_0, window_bounds = array<i64: 2, 16, 32>}, {transform_indices = @transform_1, window_bounds = array<i64: 2, 32>}, {pipeline_mode = #tpu.pipeline_mode<synchronous>, transform_indices = @transform_2, window_bounds = array<i64: 32, 32>}, {pipeline_mode = #tpu.pipeline_mode<synchronous>, transform_indices = @transform_3, window_bounds = array<i64: 1, 32>}, {pipeline_mode = #tpu.pipeline_mode<synchronous>, transform_indices = @transform_4, window_bounds = array<i64: 32, 32>}, {pipeline_mode = #tpu.pipeline_mode<synchronous>, transform_indices = @transform_5, window_bounds = array<i64: 1, 32>}, {pipeline_mode = #tpu.pipeline_mode<synchronous>, transform_indices = @transform_6, window_bounds = array<i64: 1, 32>}, {transform_indices = @transform_7, window_bounds = array<i64: 1>}, {transform_indices = @transform_8, window_bounds = array<i64: 2, 32>}, {transform_indices = @transform_9, window_bounds = array<i64: 2, 16>}]} {
    %c0 = arith.constant 0 : index
    %c0_0 = arith.constant 0 : index
    %c0_1 = arith.constant 0 : index
    %0 = vector.load %arg1[%c0, %c0_0, %c0_1] : memref<2x16x32xf32, #tpu.memory_space<vmem>>, vector<2x16x32xf32>
    %c0_2 = arith.constant 0 : index
    %c0_3 = arith.constant 0 : index
    %1 = vector.load %arg2[%c0_2, %c0_3] : memref<2x32xf32, #tpu.memory_space<vmem>>, vector<2x32xf32>
    %2 = vector.shape_cast %0 : vector<2x16x32xf32> to vector<32x32xf32>
    %c0_4 = arith.constant 0 : index
    %c0_5 = arith.constant 0 : index
    %3 = vector.load %arg3[%c0_4, %c0_5] : memref<32x32xf32, #tpu.memory_space<vmem>>, vector<32x32xf32>
    %cst = arith.constant dense<0.000000e+00> : vector<32x32xf32>
    %4 = tpu.matmul %2, %3, %cst {dimension_numbers = #tpu.dot_dimension_numbers<[1], [0], [0], [1], [0, 0, 1, 1], [], []>} : vector<32x32xf32>, vector<32x32xf32>, vector<32x32xf32> -> vector<32x32xf32>
    %c0_6 = arith.constant 0 : index
    %c0_7 = arith.constant 0 : index
    %5 = vector.load %arg4[%c0_6, %c0_7] : memref<1x32xf32, #tpu.memory_space<vmem>>, vector<1x32xf32>
    %6 = vector.broadcast %5 : vector<1x32xf32> to vector<32x32xf32>
    %7 = arith.addf %4, %6 : vector<32x32xf32>
    %c0_8 = arith.constant 0 : index
    %c0_9 = arith.constant 0 : index
    %8 = vector.load %arg5[%c0_8, %c0_9] : memref<32x32xf32, #tpu.memory_space<vmem>>, vector<32x32xf32>
    %cst_10 = arith.constant dense<0.000000e+00> : vector<2x32xf32>
    %9 = tpu.matmul %1, %8, %cst_10 {dimension_numbers = #tpu.dot_dimension_numbers<[1], [0], [0], [1], [0, 0, 1, 1], [], []>} : vector<2x32xf32>, vector<32x32xf32>, vector<2x32xf32> -> vector<2x32xf32>
    %c0_11 = arith.constant 0 : index
    %c0_12 = arith.constant 0 : index
    %10 = vector.load %arg6[%c0_11, %c0_12] : memref<1x32xf32, #tpu.memory_space<vmem>>, vector<1x32xf32>
    %11 = vector.broadcast %10 : vector<1x32xf32> to vector<2x32xf32>
    %12 = arith.addf %9, %11 : vector<2x32xf32>
    %13 = vector.shape_cast %7 : vector<32x32xf32> to vector<2x16x32xf32>
    %14 = vector.shape_cast %12 : vector<2x32xf32> to vector<2x1x32xf32>
    %15 = vector.broadcast %14 : vector<2x1x32xf32> to vector<2x16x32xf32>
    %16 = arith.addf %13, %15 : vector<2x16x32xf32>
    %cst_13 = arith.constant 0.000000e+00 : f32
    %17 = vector.broadcast %cst_13 : f32 to vector<2x16x32xf32>
    %18 = arith.maximumf %16, %17 : vector<2x16x32xf32>
    %c0_14 = arith.constant 0 : index
    %c0_15 = arith.constant 0 : index
    %19 = vector.load %arg7[%c0_14, %c0_15] : memref<1x32xf32, #tpu.memory_space<vmem>>, vector<1x32xf32>
    %20 = vector.shape_cast %19 : vector<1x32xf32> to vector<1x1x32xf32>
    %21 = vector.broadcast %20 : vector<1x1x32xf32> to vector<2x16x32xf32>
    %22 = arith.mulf %18, %21 : vector<2x16x32xf32>
    %cst_16 = arith.constant dense<0.000000e+00> : vector<2x16xf32>
    %23 = vector.multi_reduction <add>, %22, %cst_16 [2] : vector<2x16x32xf32> to vector<2x16xf32>
    %c0_17 = arith.constant 0 : index
    %24 = memref.load %arg8[%c0_17] : memref<1xf32, #tpu.memory_space<smem>>
    %25 = vector.broadcast %24 : f32 to vector<2x16xf32>
    %26 = arith.addf %23, %25 : vector<2x16xf32>
    %cst_18 = arith.constant dense<0xFF800000> : vector<2xf32>
    %27 = vector.multi_reduction <maximumf>, %26, %cst_18 [1] : vector<2x16xf32> to vector<2xf32>
    %28 = vector.shape_cast %27 : vector<2xf32> to vector<2x1xf32>
    %29 = vector.broadcast %28 : vector<2x1xf32> to vector<2x16xf32>
    %30 = arith.subf %26, %29 : vector<2x16xf32>
    %31 = math.exp %30 : vector<2x16xf32>
    %cst_19 = arith.constant dense<0.000000e+00> : vector<2xf32>
    %32 = vector.multi_reduction <add>, %31, %cst_19 [1] : vector<2x16xf32> to vector<2xf32>
    %33 = vector.shape_cast %32 : vector<2xf32> to vector<2x1xf32>
    %34 = tpu.reciprocal %33 {approx = true} : vector<2x1xf32> -> vector<2x1xf32>
    %35 = vector.broadcast %34 : vector<2x1xf32> to vector<2x16xf32>
    %36 = arith.mulf %31, %35 : vector<2x16xf32>
    %37 = vector.shape_cast %36 : vector<2x16xf32> to vector<2x1x16xf32>
    "tpu.trace_start"() <{level = 10 : i32, message = "bqp,bpe->bqe"}> : () -> ()
    %cst_20 = arith.constant dense<0.000000e+00> : vector<2x1x32xf32>
    %38 = tpu.matmul %37, %0, %cst_20 {dimension_numbers = #tpu.dot_dimension_numbers<[2], [1], [1], [2], [0, 0, 0, 1, 1, 2], [0], [0]>} : vector<2x1x16xf32>, vector<2x16x32xf32>, vector<2x1x32xf32> -> vector<2x1x32xf32>
    "tpu.trace_stop"() : () -> ()
    %39 = vector.shape_cast %38 : vector<2x1x32xf32> to vector<2x32xf32>
    %c0_21 = arith.constant 0 : index
    %c0_22 = arith.constant 0 : index
    %40 = vector.load %arg9[%c0_21, %c0_22] : memref<2x32xf32, #tpu.memory_space<vmem>>, vector<2x32xf32>
    tpu.vector_store %arg9[%c0_21, %c0_22], %39 {strides = array<i32>} : memref<2x32xf32, #tpu.memory_space<vmem>>, vector<2x32xf32>,
    %c0_23 = arith.constant 0 : index
    %c0_24 = arith.constant 0 : index
    %41 = vector.load %arg10[%c0_23, %c0_24] : memref<2x16xf32, #tpu.memory_space<vmem>>, vector<2x16xf32>
    tpu.vector_store %arg10[%c0_23, %c0_24], %36 {strides = array<i32>} : memref<2x16xf32, #tpu.memory_space<vmem>>, vector<2x16xf32>,
    return
  }
  func.func @transform_0(%arg0: i32) -> (i32, i32, i32) {
    %c0_i32 = arith.constant 0 : i32
    %c0_i32_0 = arith.constant 0 : i32
    %c0_i32_1 = arith.constant 0 : i32
    return %arg0, %c0_i32, %c0_i32_0 : i32, i32, i32
  }
  func.func @transform_1(%arg0: i32) -> (i32, i32) {
    %c0_i32 = arith.constant 0 : i32
    %c0_i32_0 = arith.constant 0 : i32
    return %arg0, %c0_i32 : i32, i32
  }
  func.func @transform_2(%arg0: i32) -> (i32, i32) {
    %c0_i32 = arith.constant 0 : i32
    %c0_i32_0 = arith.constant 0 : i32
    %c0_i32_1 = arith.constant 0 : i32
    return %c0_i32, %c0_i32_0 : i32, i32
  }
  func.func @transform_3(%arg0: i32) -> (i32, i32) {
    %c0_i32 = arith.constant 0 : i32
    %c0_i32_0 = arith.constant 0 : i32
    %c0_i32_1 = arith.constant 0 : i32
    return %c0_i32, %c0_i32_0 : i32, i32
  }
  func.func @transform_4(%arg0: i32) -> (i32, i32) {
    %c0_i32 = arith.constant 0 : i32
    %c0_i32_0 = arith.constant 0 : i32
    %c0_i32_1 = arith.constant 0 : i32
    return %c0_i32, %c0_i32_0 : i32, i32
  }
  func.func @transform_5(%arg0: i32) -> (i32, i32) {
    %c0_i32 = arith.constant 0 : i32
    %c0_i32_0 = arith.constant 0 : i32
    %c0_i32_1 = arith.constant 0 : i32
    return %c0_i32, %c0_i32_0 : i32, i32
  }
  func.func @transform_6(%arg0: i32) -> (i32, i32) {
    %c0_i32 = arith.constant 0 : i32
    %c0_i32_0 = arith.constant 0 : i32
    %c0_i32_1 = arith.constant 0 : i32
    return %c0_i32, %c0_i32_0 : i32, i32
  }
  func.func @transform_7(%arg0: i32) -> i32 {
    %c0_i32 = arith.constant 0 : i32
    %c0_i32_0 = arith.constant 0 : i32
    return %c0_i32 : i32
  }
  func.func @transform_8(%arg0: i32) -> (i32, i32) {
    %c0_i32 = arith.constant 0 : i32
    %c0_i32_0 = arith.constant 0 : i32
    return %arg0, %c0_i32 : i32, i32
  }
  func.func @transform_9(%arg0: i32) -> (i32, i32) {
    %c0_i32 = arith.constant 0 : i32
    %c0_i32_0 = arith.constant 0 : i32
    return %arg0, %c0_i32 : i32, i32
  }
}

</mosaic_0001>

<llo_original>
// kernel: tpu_custom_call.1
$region0: #{tpu_custom_call.1}
  #allocation0 [shape = 'u32[]', space=smem, size = 0x4, offset = 0x4, fixed_abs, tag = 'smem constant byte address 0x4 - core index']
  #allocation1 [shape = 'u32[144,128]{1,0:T(1,128)}', space=vmem, size = 0x12000, scoped, tag = 'internal scratch']
  #allocation2 [shape = 'f32[1]{0:T(128)S(6)}', space=smem, size = 0x200, scoped, tag = 'scoped memory for tpu_custom_call.1']
  %s0 = inlined_call_operand.hbm [shape: f32[2,16,32], index: 0, kind: input, shape index: {}]
  %s1 = inlined_call_operand.vmem [shape: f32[2,32], index: 1, kind: input, shape index: {}]
  %s2 = inlined_call_operand.hbm [shape: f32[32,32], index: 2, kind: input, shape index: {}]
  %s3 = inlined_call_operand.vmem [shape: f32[1,32], index: 3, kind: input, shape index: {}]
  %s4 = inlined_call_operand.hbm [shape: f32[32,32], index: 4, kind: input, shape index: {}]
  %s5 = inlined_call_operand.vmem [shape: f32[1,32], index: 5, kind: input, shape index: {}]
  %s6 = inlined_call_operand.vmem [shape: f32[1,32], index: 6, kind: input, shape index: {}]
  %s7 = inlined_call_operand.<no memory space> [shape: f32[1], index: 7, kind: input, shape index: {}]
  %s8 = inlined_call_operand.hbm [shape: f32[2,32], index: 8, kind: output, shape index: {0}]
  %s9 = inlined_call_operand.hbm [shape: f32[2,16], index: 9, kind: output, shape index: {1}]
  %10 = xla_tuple %s8, %s9
  %s11 = sld [smem:[#allocation0]]
  $region62: #{tpu_custom_call.1} parent=0
    _
  %s13 = ssub.s32 1, %s11
  %s14 = scalar_select 0, %s13, %s11
  %15 = sst [smem:[#allocation2]] %s7
  $region1: #{tpu_custom_call.1} parent=0
    #allocation3 [shape = 'u8[16384]{0}', space=vmem, size = 0x4000, scoped, tag = 'input window, operand 0, single buffered']
    #allocation4 [shape = 's32[1]{0}', space=sflag, size = 0x4, scoped, tag = 'scoped memory for tpu_custom_call.1']
    #allocation5 [shape = 's32[1]{0}', space=sflag, size = 0x4, scoped, tag = 'scoped memory for tpu_custom_call.1']
    #allocation6 [shape = 'u8[16384]{0}', space=vmem, size = 0x4000, scoped, tag = 'input window, operand 2, single buffered']
    #allocation7 [shape = 's32[1]{0}', space=sflag, size = 0x4, scoped, tag = 'scoped memory for tpu_custom_call.1']
    #allocation8 [shape = 'u8[16384]{0}', space=vmem, size = 0x4000, scoped, tag = 'input window, operand 4, single buffered']
    #allocation9 [shape = 'u8[1024]{0}', space=vmem, size = 0x400, scoped, tag = 'output window, operand 0, single buffered']
    #allocation10 [shape = 'u8[1024]{0}', space=vmem, size = 0x400, scoped, tag = 'output window, operand 1, single buffered']
    #allocation11 [shape = 's32[1]{0}', space=sflag, size = 0x4, scoped, tag = 'scoped memory for tpu_custom_call.1']
    %16 = vsyncpa [#allocation4], 0
    %17 = vsyncpa [#allocation7], 0
    %18 = vsyncpa [#allocation5], 0
    %19 = vsyncpa [#allocation11], 0
    // Predicated region
    $region2: #{tpu_custom_call.1} parent=1 // pred_check
      _
    $region3: #{tpu_custom_call.1} parent=1 // pred_check_branch
      %21 = sbr.rel (0) target = $region5
    $region4: #{tpu_custom_call.1} parent=1 // pred_region
      %s23 = ssub.s32 512, 512
      %24 = vsyncadd [#allocation4], %s23
      %s25 = sshll.u32 [#allocation3], 4
      %s26 = int_to_ptr.vmem [resolvable:$true] %s25
      %31 = dma.hbm_to_vmem [thread:$0]  %s0, 512, %s26, [#allocation4], 128, 128, 8
    $region5: #{tpu_custom_call.1} parent=1 // pred_fallthru
      _
    // Predicated region
    $region6: #{tpu_custom_call.1} parent=1 // pred_check
      _
    $region7: #{tpu_custom_call.1} parent=1 // pred_check_branch
      %33 = sbr.rel (0) target = $region9
    $region8: #{tpu_custom_call.1} parent=1 // pred_region
      _
    $region9: #{tpu_custom_call.1} parent=1 // pred_fallthru
      _
    // Predicated region
    $region10: #{tpu_custom_call.1} parent=1 // pred_check
      _
    $region11: #{tpu_custom_call.1} parent=1 // pred_check_branch
      %35 = sbr.rel (0) target = $region13
    $region12: #{tpu_custom_call.1} parent=1 // pred_region
      %s37 = ssub.s32 512, 512
      %38 = vsyncadd [#allocation7], %s37
      %s39 = sshll.u32 [#allocation6], 4
      %s40 = int_to_ptr.vmem [resolvable:$true] %s39
      %45 = dma.hbm_to_vmem [thread:$0]  %s2, 512, %s40, [#allocation7], 128, 128, 8
    $region13: #{tpu_custom_call.1} parent=1 // pred_fallthru
      _
    // Predicated region
    $region14: #{tpu_custom_call.1} parent=1 // pred_check
      _
    $region15: #{tpu_custom_call.1} parent=1 // pred_check_branch
      %47 = sbr.rel (0) target = $region17
    $region16: #{tpu_custom_call.1} parent=1 // pred_region
      _
    $region17: #{tpu_custom_call.1} parent=1 // pred_fallthru
      _
    // Predicated region
    $region18: #{tpu_custom_call.1} parent=1 // pred_check
      _
    $region19: #{tpu_custom_call.1} parent=1 // pred_check_branch
      %49 = sbr.rel (0) target = $region21
    $region20: #{tpu_custom_call.1} parent=1 // pred_region
      %s51 = ssub.s32 512, 512
      %52 = vsyncadd [#allocation7], %s51
      %s53 = sshll.u32 [#allocation8], 4
      %s54 = int_to_ptr.vmem [resolvable:$true] %s53
      %59 = dma.hbm_to_vmem [thread:$0]  %s4, 512, %s54, [#allocation7], 128, 128, 8
    $region21: #{tpu_custom_call.1} parent=1 // pred_fallthru
      _
    // Predicated region
    $region22: #{tpu_custom_call.1} parent=1 // pred_check
      _
    $region23: #{tpu_custom_call.1} parent=1 // pred_check_branch
      %61 = sbr.rel (0) target = $region25
    $region24: #{tpu_custom_call.1} parent=1 // pred_region
      _
    $region25: #{tpu_custom_call.1} parent=1 // pred_fallthru
      _
    // Predicated region
    $region26: #{tpu_custom_call.1} parent=1 // pred_check
      _
    $region27: #{tpu_custom_call.1} parent=1 // pred_check_branch
      %63 = sbr.rel (0) target = $region29
    $region28: #{tpu_custom_call.1} parent=1 // pred_region
      _
    $region29: #{tpu_custom_call.1} parent=1 // pred_fallthru
      _
    // Predicated region
    $region30: #{tpu_custom_call.1} parent=1 // pred_check
      _
    $region31: #{tpu_custom_call.1} parent=1 // pred_check_branch
      %65 = sbr.rel (0) target = $region33
    $region32: #{tpu_custom_call.1} parent=1 // pred_region
      _
    $region33: #{tpu_custom_call.1} parent=1 // pred_fallthru
      _
    // Predicated region
    $region34: #{tpu_custom_call.1} parent=1 // pred_check
      _
    $region35: #{tpu_custom_call.1} parent=1 // pred_check_branch
      %67 = sbr.rel (0) target = $region37
    $region36: #{tpu_custom_call.1} parent=1 // pred_region
      %68 = dma.done [#allocation4], 512
    $region37: #{tpu_custom_call.1} parent=1 // pred_fallthru
      _
    // Predicated region
    $region38: #{tpu_custom_call.1} parent=1 // pred_check
      _
    $region39: #{tpu_custom_call.1} parent=1 // pred_check_branch
      %70 = sbr.rel (0) target = $region41
    $region40: #{tpu_custom_call.1} parent=1 // pred_region
      %71 = dma.done [#allocation7], 512
    $region41: #{tpu_custom_call.1} parent=1 // pred_fallthru
      _
    // Predicated region
    $region42: #{tpu_custom_call.1} parent=1 // pred_check
      _
    $region43: #{tpu_custom_call.1} parent=1 // pred_check_branch
      %73 = sbr.rel (0) target = $region45
    $region44: #{tpu_custom_call.1} parent=1 // pred_region
      %74 = dma.done [#allocation7], 512
    $region45: #{tpu_custom_call.1} parent=1 // pred_fallthru
      _
    %v75 = vld [vmem:[#allocation3] sm:$0xff]
    %v76 = vld [vmem:[#allocation3 + $0x8] sm:$0xff]
    %v77 = vld [vmem:[#allocation3 + $0x10] sm:$0xff]
    %v78 = vld [vmem:[#allocation3 + $0x18] sm:$0xff]
    %v79 = vld [vmem:[%s1] sm:$0x3]
    %v80 = vld [vmem:[#allocation6] sm:$0xff]
    %v81 = vld [vmem:[#allocation6 + $0x8] sm:$0xff]
    %v82 = vld [vmem:[#allocation6 + $0x10] sm:$0xff]
    %v83 = vld [vmem:[#allocation6 + $0x18] sm:$0xff]
    %v84 = vld [vmem:[%s3] sm:$0x1]
    %v86 = vlaneseq
    %v87 = vshrl.u32 %v86, 7
    %v88 = vsub.s32 0, %v87
    %v89 = vrot.slane %v84, %v88
    %vm91 = vcmask 261120
    %v93 = vsel %vm91, %v75, 0
    %v96 = vsel %vm91, %v76, 0
    %v99 = vsel %vm91, %v77, 0
    %v102 = vsel %vm91, %v78, 0
    %104 = vmatprep.subr.mxu0 0.0
    %105 = vmatpush1.msra.mxu0 %v80
    %106 = vmatprep.subr.mxu0 0.0
    %107 = vmatpush1.msra.mxu0 %v81
    %108 = vmatprep.subr.mxu0 0.0
    %109 = vmatpush1.msra.mxu0 %v82
    %110 = vmatprep.subr.mxu0 0.0
    %111 = vmatpush1.msra.mxu0 %v83
    %112 = vmatprep.subr.mxu0 0.0
    %113 = vmatpush1.msra.mxu0 0.0
    %114 = vmatprep.subr.mxu0 0.0
    %115 = vmatpush1.msra.mxu0 0.0
    %116 = vmatprep.subr.mxu0 0.0
    %117 = vmatpush1.msra.mxu0 0.0
    %118 = vmatprep.subr.mxu0 0.0
    %119 = vmatpush1.msra.mxu0 0.0
    %120 = vmatprep.subr.mxu0 0.0
    %121 = vmatpush1.msra.mxu0 0.0
    %122 = vmatprep.subr.mxu0 0.0
    %123 = vmatpush1.msra.mxu0 0.0
    %124 = vmatprep.subr.mxu0 0.0
    %125 = vmatpush1.msra.mxu0 0.0
    %126 = vmatprep.subr.mxu0 0.0
    %127 = vmatpush1.msra.mxu0 0.0
    %128 = vmatprep.subr.mxu0 0.0
    %129 = vmatpush1.msra.mxu0 0.0
    %130 = vmatprep.subr.mxu0 0.0
    %131 = vmatpush1.msra.mxu0 0.0
    %132 = vmatprep.subr.mxu0 0.0
    %133 = vmatpush1.msra.mxu0 0.0
    %134 = vmatprep.subr.mxu0 0.0
    %135 = vmatpush1.msra.mxu0 0.0
    %136 = vmatprep.subr.mxu0 0.0
    %137 = vmatpush1.msra.mxu0 0.0
    %138 = vmatprep.subr.mxu0 0.0
    %139 = vmatpush1.msra.mxu0 0.0
    %140 = vmatprep.subr.mxu0 0.0
    %141 = vmatpush1.msra.mxu0 0.0
    %142 = vmatprep.subr.mxu0 0.0
    %143 = vmatpush1.msra.mxu0 0.0
    %144 = vmatprep.subr.mxu0 0.0
    %145 = vmatpush1.msra.mxu0 0.0
    %146 = vmatprep.subr.mxu0 0.0
    %147 = vmatpush1.msra.mxu0 0.0
    %148 = vmatprep.subr.mxu0 0.0
    %149 = vmatpush1.msra.mxu0 0.0
    %150 = vmatprep.subr.mxu0 0.0
    %151 = vmatpush1.msra.mxu0 0.0
    %152 = vmatprep.subr.mxu0 0.0
    %153 = vmatpush1.msra.mxu0 0.0
    %154 = vmatprep.subr.mxu0 0.0
    %155 = vmatpush1.msra.mxu0 0.0
    %156 = vmatprep.subr.mxu0 0.0
    %157 = vmatpush1.msra.mxu0 0.0
    %158 = vmatprep.subr.mxu0 0.0
    %159 = vmatpush1.msra.mxu0 0.0
    %160 = vmatprep.subr.mxu0 0.0
    %161 = vmatpush1.msra.mxu0 0.0
    %162 = vmatprep.subr.mxu0 0.0
    %163 = vmatpush1.msra.mxu0 0.0
    %164 = vmatprep.subr.mxu0 0.0
    %165 = vmatpush1.msra.mxu0 0.0
    %166 = vmatprep.subr.mxu0 0.0
    %167 = vmatpush1.msra.mxu0 0.0
    %168 = vmatprep.mubr.f32.mxu0 0.0
    %169 = vmatmul.mubr.f32.gmra.mrb[0].mxu0 %v93
    %v170 = vpop.f32.mrb[0].mxu0
    %v171 = vadd.f32 %v89, %v170
    %v172 = vpop.f32.mrb[0].mxu0
    %173 = vmatprep.mubr.f32.mxu0 0.0
    %174 = vmatmul.mubr.f32.gmra.mrb[0].mxu0 %v96
    %v175 = vpop.f32.mrb[0].mxu0
    %v176 = vadd.f32 %v89, %v175
    %v177 = vpop.f32.mrb[0].mxu0
    %178 = vmatprep.mubr.f32.mxu0 0.0
    %179 = vmatmul.mubr.f32.gmra.mrb[0].mxu0 %v99
    %v180 = vpop.f32.mrb[0].mxu0
    %v181 = vadd.f32 %v89, %v180
    %v182 = vpop.f32.mrb[0].mxu0
    %183 = vmatprep.mubr.f32.mxu0 0.0
    %184 = vmatmul.mubr.f32.gmra.mrb[0].mxu0 %v102
    %v185 = vpop.f32.mrb[0].mxu0
    %v186 = vadd.f32 %v89, %v185
    %v187 = vpop.f32.mrb[0].mxu0
    %188 = vdwg.mxu0
    %v189 = vld [vmem:[#allocation8] sm:$0xff]
    %v190 = vld [vmem:[#allocation8 + $0x8] sm:$0xff]
    %v191 = vld [vmem:[#allocation8 + $0x10] sm:$0xff]
    %v192 = vld [vmem:[#allocation8 + $0x18] sm:$0xff]
    %v193 = vld [vmem:[%s5] sm:$0x1]
    %v195 = vlaneseq
    %v196 = vshrl.u32 %v195, 7
    %v197 = vsub.s32 0, %v196
    %v198 = vrot.slane %v193, %v197
    %v201 = vsel %vm91, %v79, 0
    %203 = vmatprep.subr.mxu0 0.0
    %204 = vmatpush1.msra.mxu0 %v189
    %205 = vmatprep.subr.mxu0 0.0
    %206 = vmatpush1.msra.mxu0 %v190
    %207 = vmatprep.subr.mxu0 0.0
    %208 = vmatpush1.msra.mxu0 %v191
    %209 = vmatprep.subr.mxu0 0.0
    %210 = vmatpush1.msra.mxu0 %v192
    %211 = vmatprep.subr.mxu0 0.0
    %212 = vmatpush1.msra.mxu0 0.0
    %213 = vmatprep.subr.mxu0 0.0
    %214 = vmatpush1.msra.mxu0 0.0
    %215 = vmatprep.subr.mxu0 0.0
    %216 = vmatpush1.msra.mxu0 0.0
    %217 = vmatprep.subr.mxu0 0.0
    %218 = vmatpush1.msra.mxu0 0.0
    %219 = vmatprep.subr.mxu0 0.0
    %220 = vmatpush1.msra.mxu0 0.0
    %221 = vmatprep.subr.mxu0 0.0
    %222 = vmatpush1.msra.mxu0 0.0
    %223 = vmatprep.subr.mxu0 0.0
    %224 = vmatpush1.msra.mxu0 0.0
    %225 = vmatprep.subr.mxu0 0.0
    %226 = vmatpush1.msra.mxu0 0.0
    %227 = vmatprep.subr.mxu0 0.0
    %228 = vmatpush1.msra.mxu0 0.0
    %229 = vmatprep.subr.mxu0 0.0
    %230 = vmatpush1.msra.mxu0 0.0
    %231 = vmatprep.subr.mxu0 0.0
    %232 = vmatpush1.msra.mxu0 0.0
    %233 = vmatprep.subr.mxu0 0.0
    %234 = vmatpush1.msra.mxu0 0.0
    %235 = vmatprep.subr.mxu0 0.0
    %236 = vmatpush1.msra.mxu0 0.0
    %237 = vmatprep.subr.mxu0 0.0
    %238 = vmatpush1.msra.mxu0 0.0
    %239 = vmatprep.subr.mxu0 0.0
    %240 = vmatpush1.msra.mxu0 0.0
    %241 = vmatprep.subr.mxu0 0.0
    %242 = vmatpush1.msra.mxu0 0.0
    %243 = vmatprep.subr.mxu0 0.0
    %244 = vmatpush1.msra.mxu0 0.0
    %245 = vmatprep.subr.mxu0 0.0
    %246 = vmatpush1.msra.mxu0 0.0
    %247 = vmatprep.subr.mxu0 0.0
    %248 = vmatpush1.msra.mxu0 0.0
    %249 = vmatprep.subr.mxu0 0.0
    %250 = vmatpush1.msra.mxu0 0.0
    %251 = vmatprep.subr.mxu0 0.0
    %252 = vmatpush1.msra.mxu0 0.0
    %253 = vmatprep.subr.mxu0 0.0
    %254 = vmatpush1.msra.mxu0 0.0
    %255 = vmatprep.subr.mxu0 0.0
    %256 = vmatpush1.msra.mxu0 0.0
    %257 = vmatprep.subr.mxu0 0.0
    %258 = vmatpush1.msra.mxu0 0.0
    %259 = vmatprep.subr.mxu0 0.0
    %260 = vmatpush1.msra.mxu0 0.0
    %261 = vmatprep.subr.mxu0 0.0
    %262 = vmatpush1.msra.mxu0 0.0
    %263 = vmatprep.subr.mxu0 0.0
    %264 = vmatpush1.msra.mxu0 0.0
    %265 = vmatprep.subr.mxu0 0.0
    %266 = vmatpush1.msra.mxu0 0.0
    %267 = vmatprep.mubr.f32.mxu0 0.0
    %268 = vmatmul.mubr.f32.gmra.mrb[0].mxu0 %v201
    %v269 = vpop.f32.mrb[0].mxu0
    %v270 = vadd.f32 %v198, %v269
    %v271 = vpop.f32.mrb[0].mxu0
    %272 = vdwg.mxu0
    %v275 = vunpack.c.l.s4 1966171168
    %v276 = vunpack.c.0.s8 %v275
    %v277 = vlaneseq
    %v278 = vshrl.u32 %v277, 7
    %v279 = vsub.s32 %v276, %v278
    %v280 = vrot.slane %v270, %v279
    %v281 = vcombine.high %v280, %v280
    %v283 = vunpack.c.l.s4 1966171168
    %v284 = vunpack.c.0.s8 %v283
    %v285 = vlaneseq
    %v286 = vshrl.u32 %v285, 7
    %v287 = vsub.s32 %v284, %v286
    %v288 = vrot.slane %v280, %v287
    %v290 = vunpack.c.l.s4 1966171168
    %v291 = vunpack.c.0.s8 %v290
    %v292 = vlaneseq
    %v293 = vshrl.u32 %v292, 7
    %v294 = vsub.s32 %v291, %v293
    %v295 = vrot.slane %v281, %v294
    %v296 = vlaneseq
    %v297 = vshrl.u32 %v296, 7
    %v298 = vsub.s32 0, %v297
    %v299 = vrot.slane %v288, %v298
    %v300 = vlaneseq
    %v301 = vshrl.u32 %v300, 7
    %v302 = vsub.s32 0, %v301
    %v303 = vrot.slane %v295, %v302
    %v306 = vadd.f32 %v171, %v299
    %v307 = vadd.f32 %v176, %v299
    %v308 = vadd.f32 %v181, %v303
    %v309 = vadd.f32 %v186, %v303
    %v310 = vmax.f32 %v306, 0.0
    %v311 = vmax.f32 %v307, 0.0
    %v312 = vmax.f32 %v308, 0.0
    %v313 = vmax.f32 %v309, 0.0
    %v314 = vld [vmem:[%s6] sm:$0x1]
    %v316 = vlaneseq
    %v317 = vshrl.u32 %v316, 7
    %v318 = vsub.s32 0, %v317
    %v319 = vrot.slane %v314, %v318
    %v321 = vmul.f32 %v310, %v319
    %v322 = vmul.f32 %v311, %v319
    %v323 = vmul.f32 %v312, %v319
    %v324 = vmul.f32 %v313, %v319
    %v325 = vsel %vm91, %v321, 0.0
    %326 = vadd.xlane.f32.xlu0 %v325
    %v327 = vpop.xlane.xlu0 %326
    %v328 = vsel %vm91, %v322, 0.0
    %329 = vadd.xlane.f32.xlu0 %v328
    %v330 = vpop.xlane.xlu0 %329
    %v331 = vsel %vm91, %v323, 0.0
    %332 = vadd.xlane.f32.xlu0 %v331
    %v333 = vpop.xlane.xlu0 %332
    %v334 = vsel %vm91, %v324, 0.0
    %335 = vadd.xlane.f32.xlu0 %v334
    %v336 = vpop.xlane.xlu0 %335
    %s337 = sld [smem:[#allocation2]]
    %v338 = vstv %s337
    %v339 = vadd.f32 %v327, %v338
    %v340 = vadd.f32 %v330, %v338
    %v341 = vadd.f32 %v333, %v338
    %v342 = vadd.f32 %v336, %v338
    %v347 = vlaneseq
    %v348 = vand.u32 %v347, 127
    %v349 = vlaneseq
    %v350 = vshrl.u32 %v349, 7
    %v351 = vsub.s32 %v348, %v350
    %v352 = vrot.slane %v339, %v351
    %v353 = vadd.s32 %v348, 4294967288
    %v354 = vlaneseq
    %v355 = vshrl.u32 %v354, 7
    %v356 = vsub.s32 %v353, %v355
    %v357 = vrot.slane %v340, %v356
    %vm358 = vcmask 130112
    %v359 = vsel %vm358, %v357, %v352
    %v360 = vlaneseq
    %v361 = vshrl.u32 %v360, 7
    %v362 = vsub.s32 %v348, %v361
    %v363 = vrot.slane %v341, %v362
    %v364 = vlaneseq
    %v365 = vshrl.u32 %v364, 7
    %v366 = vsub.s32 %v353, %v365
    %v367 = vrot.slane %v342, %v366
    %v368 = vsel %vm358, %v367, %v363
    %vm369 = vcmask 1041409
    %v370 = vsel %vm369, %v368, %v359
    %vm372 = vcmask 123904
    %v373 = vsel %vm372, %v370, -inf
    %374 = vmax.xlane.f32.xlu0 %v373
    %v375 = vpop.xlane.xlu0 %374
    %v377 = vlaneseq
    %v378 = vshrl.u32 %v377, 7
    %v379 = vsub.s32 0, %v378
    %v380 = vrot.slane %v375, %v379
    %v381 = vlaneseq
    %v382 = vshrl.u32 %v381, 7
    %v383 = vsub.s32 1, %v382
    %v384 = vrot.slane %v375, %v383
    %v387 = vsub.f32 %v339, %v380
    %v388 = vsub.f32 %v340, %v380
    %v389 = vsub.f32 %v341, %v384
    %v390 = vsub.f32 %v342, %v384
    %v391 = vmul.f32 %v387, 1.442695
    %v392 = vpow.pop %v391
    %v393 = vmul.f32 %v388, 1.442695
    %v394 = vpow.pop %v393
    %v395 = vmul.f32 %v389, 1.442695
    %v396 = vpow.pop %v395
    %v397 = vmul.f32 %v390, 1.442695
    %v398 = vpow.pop %v397
    %403 = vset.pattern.permute.xlu0 0
    %404 = vperm.xlu0 %403, %v392
    %v405 = vpop.permute.xlu0 %404
    %406 = vset.pattern.permute.xlu0 0
    %407 = vperm.xlu0 %406, %v394
    %v408 = vpop.permute.xlu0 %407
    %409 = vset.pattern.permute.xlu0 0
    %410 = vperm.xlu0 %409, %v396
    %v411 = vpop.permute.xlu0 %410
    %412 = vset.pattern.permute.xlu0 0
    %413 = vperm.xlu0 %412, %v398
    %v414 = vpop.permute.xlu0 %413
    %v415 = vlaneseq
    %v416 = vshrl.u32 %v415, 7
    %v417 = vsub.s32 %v348, %v416
    %v418 = vrot.slane %v405, %v417
    %v419 = vlaneseq
    %v420 = vshrl.u32 %v419, 7
    %v421 = vsub.s32 %v353, %v420
    %v422 = vrot.slane %v408, %v421
    %v423 = vsel %vm358, %v422, %v418
    %v424 = vlaneseq
    %v425 = vshrl.u32 %v424, 7
    %v426 = vsub.s32 %v348, %v425
    %v427 = vrot.slane %v411, %v426
    %v428 = vlaneseq
    %v429 = vshrl.u32 %v428, 7
    %v430 = vsub.s32 %v353, %v429
    %v431 = vrot.slane %v414, %v430
    %v432 = vsel %vm358, %v431, %v427
    %v433 = vsel %vm369, %v432, %v423
    %v435 = vsel %vm372, %v433, 0.0
    %436 = vadd.xlane.f32.xlu0 %v435
    %v437 = vpop.xlane.xlu0 %436
    %v438 = vrcp.pop %v437
    %v440 = vlaneseq
    %v441 = vshrl.u32 %v440, 7
    %v442 = vsub.s32 0, %v441
    %v443 = vrot.slane %v438, %v442
    %v444 = vlaneseq
    %v445 = vshrl.u32 %v444, 7
    %v446 = vsub.s32 1, %v445
    %v447 = vrot.slane %v438, %v446
    %v450 = vmul.f32 %v392, %v443
    %v451 = vmul.f32 %v394, %v443
    %v452 = vmul.f32 %v396, %v447
    %v453 = vmul.f32 %v398, %v447
    %456 = vset.pattern.permute.xlu0 0
    %457 = vperm.xlu0 %456, %v450
    %v458 = vpop.permute.xlu0 %457
    %459 = vset.pattern.permute.xlu0 0
    %460 = vperm.xlu0 %459, %v451
    %v461 = vpop.permute.xlu0 %460
    %v462 = vlaneseq
    %v463 = vshrl.u32 %v462, 7
    %v464 = vsub.s32 %v348, %v463
    %v465 = vrot.slane %v458, %v464
    %v466 = vlaneseq
    %v467 = vshrl.u32 %v466, 7
    %v468 = vsub.s32 %v353, %v467
    %v469 = vrot.slane %v461, %v468
    %v470 = vsel %vm358, %v469, %v465
    %vm471 = vcmask 130048
    %v472 = vsel %vm471, %v470, 0
    %474 = vmatprep.subr.mxu0 0.0
    %475 = vmatpush1.msra.mxu0 %v75
    %476 = vmatprep.subr.mxu0 0.0
    %477 = vmatpush1.msra.mxu0 %v76
    %478 = vmatprep.subr.mxu0 0.0
    %479 = vmatpush1.msra.mxu0 0.0
    %480 = vmatprep.subr.mxu0 0.0
    %481 = vmatpush1.msra.mxu0 0.0
    %482 = vmatprep.subr.mxu0 0.0
    %483 = vmatpush1.msra.mxu0 0.0
    %484 = vmatprep.subr.mxu0 0.0
    %485 = vmatpush1.msra.mxu0 0.0
    %486 = vmatprep.subr.mxu0 0.0
    %487 = vmatpush1.msra.mxu0 0.0
    %488 = vmatprep.subr.mxu0 0.0
    %489 = vmatpush1.msra.mxu0 0.0
    %490 = vmatprep.subr.mxu0 0.0
    %491 = vmatpush1.msra.mxu0 0.0
    %492 = vmatprep.subr.mxu0 0.0
    %493 = vmatpush1.msra.mxu0 0.0
    %494 = vmatprep.subr.mxu0 0.0
    %495 = vmatpush1.msra.mxu0 0.0
    %496 = vmatprep.subr.mxu0 0.0
    %497 = vmatpush1.msra.mxu0 0.0
    %498 = vmatprep.subr.mxu0 0.0
    %499 = vmatpush1.msra.mxu0 0.0
    %500 = vmatprep.subr.mxu0 0.0
    %501 = vmatpush1.msra.mxu0 0.0
    %502 = vmatprep.subr.mxu0 0.0
    %503 = vmatpush1.msra.mxu0 0.0
    %504 = vmatprep.subr.mxu0 0.0
    %505 = vmatpush1.msra.mxu0 0.0
    %506 = vmatprep.subr.mxu0 0.0
    %507 = vmatpush1.msra.mxu0 0.0
    %508 = vmatprep.subr.mxu0 0.0
    %509 = vmatpush1.msra.mxu0 0.0
    %510 = vmatprep.subr.mxu0 0.0
    %511 = vmatpush1.msra.mxu0 0.0
    %512 = vmatprep.subr.mxu0 0.0
    %513 = vmatpush1.msra.mxu0 0.0
    %514 = vmatprep.subr.mxu0 0.0
    %515 = vmatpush1.msra.mxu0 0.0
    %516 = vmatprep.subr.mxu0 0.0
    %517 = vmatpush1.msra.mxu0 0.0
    %518 = vmatprep.subr.mxu0 0.0
    %519 = vmatpush1.msra.mxu0 0.0
    %520 = vmatprep.subr.mxu0 0.0
    %521 = vmatpush1.msra.mxu0 0.0
    %522 = vmatprep.subr.mxu0 0.0
    %523 = vmatpush1.msra.mxu0 0.0
    %524 = vmatprep.subr.mxu0 0.0
    %525 = vmatpush1.msra.mxu0 0.0
    %526 = vmatprep.subr.mxu0 0.0
    %527 = vmatpush1.msra.mxu0 0.0
    %528 = vmatprep.subr.mxu0 0.0
    %529 = vmatpush1.msra.mxu0 0.0
    %530 = vmatprep.subr.mxu0 0.0
    %531 = vmatpush1.msra.mxu0 0.0
    %532 = vmatprep.subr.mxu0 0.0
    %533 = vmatpush1.msra.mxu0 0.0
    %534 = vmatprep.subr.mxu0 0.0
    %535 = vmatpush1.msra.mxu0 0.0
    %536 = vmatprep.subr.mxu0 0.0
    %537 = vmatpush1.msra.mxu0 0.0
    %538 = vmatprep.mubr.f32.mxu0 0.0
    %539 = vmatmul.mubr.f32.gmra.mrb[0].mxu0 %v472
    %v540 = vpop.f32.mrb[0].mxu0
    %v541 = vadd.f32 0.0, %v540
    %v542 = vpop.f32.mrb[0].mxu0
    %543 = vdwg.mxu0
    %546 = vset.pattern.permute.xlu0 0
    %547 = vperm.xlu0 %546, %v452
    %v548 = vpop.permute.xlu0 %547
    %549 = vset.pattern.permute.xlu0 0
    %550 = vperm.xlu0 %549, %v453
    %v551 = vpop.permute.xlu0 %550
    %v552 = vlaneseq
    %v553 = vshrl.u32 %v552, 7
    %v554 = vsub.s32 %v348, %v553
    %v555 = vrot.slane %v548, %v554
    %v556 = vlaneseq
    %v557 = vshrl.u32 %v556, 7
    %v558 = vsub.s32 %v353, %v557
    %v559 = vrot.slane %v551, %v558
    %v560 = vsel %vm358, %v559, %v555
    %v561 = vsel %vm471, %v560, 0
    %563 = vmatprep.subr.mxu0 0.0
    %564 = vmatpush1.msra.mxu0 %v77
    %565 = vmatprep.subr.mxu0 0.0
    %566 = vmatpush1.msra.mxu0 %v78
    %567 = vmatprep.subr.mxu0 0.0
    %568 = vmatpush1.msra.mxu0 0.0
    %569 = vmatprep.subr.mxu0 0.0
    %570 = vmatpush1.msra.mxu0 0.0
    %571 = vmatprep.subr.mxu0 0.0
    %572 = vmatpush1.msra.mxu0 0.0
    %573 = vmatprep.subr.mxu0 0.0
    %574 = vmatpush1.msra.mxu0 0.0
    %575 = vmatprep.subr.mxu0 0.0
    %576 = vmatpush1.msra.mxu0 0.0
    %577 = vmatprep.subr.mxu0 0.0
    %578 = vmatpush1.msra.mxu0 0.0
    %579 = vmatprep.subr.mxu0 0.0
    %580 = vmatpush1.msra.mxu0 0.0
    %581 = vmatprep.subr.mxu0 0.0
    %582 = vmatpush1.msra.mxu0 0.0
    %583 = vmatprep.subr.mxu0 0.0
    %584 = vmatpush1.msra.mxu0 0.0
    %585 = vmatprep.subr.mxu0 0.0
    %586 = vmatpush1.msra.mxu0 0.0
    %587 = vmatprep.subr.mxu0 0.0
    %588 = vmatpush1.msra.mxu0 0.0
    %589 = vmatprep.subr.mxu0 0.0
    %590 = vmatpush1.msra.mxu0 0.0
    %591 = vmatprep.subr.mxu0 0.0
    %592 = vmatpush1.msra.mxu0 0.0
    %593 = vmatprep.subr.mxu0 0.0
    %594 = vmatpush1.msra.mxu0 0.0
    %595 = vmatprep.subr.mxu0 0.0
    %596 = vmatpush1.msra.mxu0 0.0
    %597 = vmatprep.subr.mxu0 0.0
    %598 = vmatpush1.msra.mxu0 0.0
    %599 = vmatprep.subr.mxu0 0.0
    %600 = vmatpush1.msra.mxu0 0.0
    %601 = vmatprep.subr.mxu0 0.0
    %602 = vmatpush1.msra.mxu0 0.0
    %603 = vmatprep.subr.mxu0 0.0
    %604 = vmatpush1.msra.mxu0 0.0
    %605 = vmatprep.subr.mxu0 0.0
    %606 = vmatpush1.msra.mxu0 0.0
    %607 = vmatprep.subr.mxu0 0.0
    %608 = vmatpush1.msra.mxu0 0.0
    %609 = vmatprep.subr.mxu0 0.0
    %610 = vmatpush1.msra.mxu0 0.0
    %611 = vmatprep.subr.mxu0 0.0
    %612 = vmatpush1.msra.mxu0 0.0
    %613 = vmatprep.subr.mxu0 0.0
    %614 = vmatpush1.msra.mxu0 0.0
    %615 = vmatprep.subr.mxu0 0.0
    %616 = vmatpush1.msra.mxu0 0.0
    %617 = vmatprep.subr.mxu0 0.0
    %618 = vmatpush1.msra.mxu0 0.0
    %619 = vmatprep.subr.mxu0 0.0
    %620 = vmatpush1.msra.mxu0 0.0
    %621 = vmatprep.subr.mxu0 0.0
    %622 = vmatpush1.msra.mxu0 0.0
    %623 = vmatprep.subr.mxu0 0.0
    %624 = vmatpush1.msra.mxu0 0.0
    %625 = vmatprep.subr.mxu0 0.0
    %626 = vmatpush1.msra.mxu0 0.0
    %627 = vmatprep.mubr.f32.mxu0 0.0
    %628 = vmatmul.mubr.f32.gmra.mrb[0].mxu0 %v561
    %v629 = vpop.f32.mrb[0].mxu0
    %v630 = vadd.f32 0.0, %v629
    %v631 = vpop.f32.mrb[0].mxu0
    %632 = vdwg.mxu0
    %v635 = vrot.slane %v630, 7
    %v636 = vsel %vm369, %v635, %v541
    %vm638 = vcmask 254976
    %639 = vst.msk [vmem:[#allocation9] sm:$0x3] %vm638, %v636
    %v640 = vsel %vm369, %v560, %v470
    %642 = vst.msk [vmem:[#allocation10] sm:$0x3] %vm372, %v640
    // Predicated region
    $region46: #{tpu_custom_call.1} parent=1 // pred_check
      _
    $region47: #{tpu_custom_call.1} parent=1 // pred_check_branch
      %644 = sbr.rel (0) target = $region49
    $region48: #{tpu_custom_call.1} parent=1 // pred_region
      %s646 = ssub.s32 32, 32
      %647 = vsyncadd [#allocation5], %s646
      %s649 = sshll.u32 [#allocation9], 4
      %s650 = int_to_ptr.vmem [resolvable:$true] %s649
      %652 = dma.vmem_to_hbm [thread:$0]  %s650, 32, %s8, [#allocation5]
    $region49: #{tpu_custom_call.1} parent=1 // pred_fallthru
      _
    // Predicated region
    $region50: #{tpu_custom_call.1} parent=1 // pred_check
      _
    $region51: #{tpu_custom_call.1} parent=1 // pred_check_branch
      %654 = sbr.rel (0) target = $region53
    $region52: #{tpu_custom_call.1} parent=1 // pred_region
      %s656 = ssub.s32 32, 32
      %657 = vsyncadd [#allocation11], %s656
      %s659 = sshll.u32 [#allocation10], 4
      %s660 = int_to_ptr.vmem [resolvable:$true] %s659
      %662 = dma.vmem_to_hbm [thread:$0]  %s660, 32, %s9, [#allocation11]
    $region53: #{tpu_custom_call.1} parent=1 // pred_fallthru
      _
    // Predicated region
    $region54: #{tpu_custom_call.1} parent=1 // pred_check
      _
    $region55: #{tpu_custom_call.1} parent=1 // pred_check_branch
      %664 = sbr.rel (0) target = $region57
    $region56: #{tpu_custom_call.1} parent=1 // pred_region
      %665 = dma.done [#allocation5], 32
    $region57: #{tpu_custom_call.1} parent=1 // pred_fallthru
      _
    // Predicated region
    $region58: #{tpu_custom_call.1} parent=1 // pred_check
      _
    $region59: #{tpu_custom_call.1} parent=1 // pred_check_branch
      %667 = sbr.rel (0) target = $region61
    $region60: #{tpu_custom_call.1} parent=1 // pred_region
      %668 = dma.done [#allocation11], 32
    $region61: #{tpu_custom_call.1} parent=1 // pred_fallthru
      _
    %669 = vsyncpa [#allocation4], 1
    %670 = vsyncpa [#allocation7], 1
    %671 = vsyncpa [#allocation5], 1
    %672 = vsyncpa [#allocation11], 1

</llo_original>
